<compile_context>
chip_gen: v5e
topology: v5e:2x2
jax: 0.10.0
libtpu: 0.0.40
codegen_flags: <defaults>
</compile_context>

<pallas_src>
import jax
import jax.numpy as jnp
from jax.experimental import pallas as pl
from jax.experimental.pallas import tpu as pltpu

IMAGE_SIZE = 784
HID1 = 100
HID2 = 50
LABELS_COUNT = 10

# Lane / MXU friendly padded hidden/output widths (weights only; x is unpadded).
H1_PAD = 128
H2_PAD = 128
OUT_PAD = 128

NEG_BIG = -1.0e30        # padded logit lanes -> exp() == 0 in the logsumexp
TILE_B_MAX = 1024        # safe under v5e's 16 MiB scoped-VMEM default; sweep up on v6e


def _round_up(x, m):
    return (x + m - 1) // m * m


def _choose_tile_b(B):
    if B <= 8:
        return B  # single block; block dims equal full array dims -> always legal
    # Aim for >= 2 grid steps (v7x dual-TC sharding), multiple of 8 sublanes,
    # capped so double-buffered x tiles + intermediates fit scoped VMEM.
    return max(8, min(TILE_B_MAX, _round_up(pl.cdiv(B, 2), 8)))


def mlp_kernel(x_ref, w0_ref, b_ref, w1_ref, w2_ref, o_ref):
    bias = b_ref[...]                                  # (3, 128) f32, VMEM-resident
    x = x_ref[...].astype(jnp.bfloat16)                # f32 HBM read, in-kernel bf16 cast

    # fc0 + relu  (bf16 MXU matmul, f32 accumulate, f32 bias)
    h0 = jnp.dot(x, w0_ref[...], preferred_element_type=jnp.float32) + bias[0:1, :]
    h0 = jnp.maximum(h0, 0.0).astype(jnp.bfloat16)

    # fc1 + relu
    h1 = jnp.dot(h0, w1_ref[...], preferred_element_type=jnp.float32) + bias[1:2, :]
    h1 = jnp.maximum(h1, 0.0).astype(jnp.bfloat16)

    # fc2 + log_softmax (padded logit lanes carry -1e30 bias -> exp == 0, so the
    # 128-lane logsumexp equals the 10-lane one exactly); store only 10 lanes.
    logits = jnp.dot(h1, w2_ref[...], preferred_element_type=jnp.float32) + bias[2:3, :]
    m = jnp.max(logits, axis=-1, keepdims=True)
    shifted = logits - m
    lse = jnp.log(jnp.sum(jnp.exp(shifted), axis=-1, keepdims=True))
    o_ref[...] = (shifted - lse)[:, :LABELS_COUNT]


def model_a_forward(x, params):
    """x: any shape that flattens to (-1, IMAGE_SIZE), e.g. (B, 1, 28, 28)."""
    w0, b_all, w1, w2 = params  # w* bf16 (out dims padded to 128); b_all (3,128) f32

    x2d = x.reshape(-1, IMAGE_SIZE).astype(jnp.float32)   # no pad, no dtype-copy for f32 input
    B = x2d.shape[0]
    tile_b = _choose_tile_b(B)
    grid = (pl.cdiv(B, tile_b),)   # partial last block (if any) is masked by Pallas

    def const_spec(shape):
        return pl.BlockSpec(shape, lambda i: (0, 0))

    in_specs = [
        pl.BlockSpec((tile_b, IMAGE_SIZE), lambda i: (i, 0)),  # x, pipelined over batch
        const_spec((IMAGE_SIZE, H1_PAD)),                      # w0 (784, 128)
        const_spec((3, H1_PAD)),                               # packed biases (3, 128)
        const_spec((H1_PAD, H2_PAD)),                          # w1 (128, 128)
        const_spec((H2_PAD, OUT_PAD)),                         # w2 (128, 128)
    ]
    out_specs = pl.BlockSpec((tile_b, LABELS_COUNT), lambda i: (i, 0))

    weight_bytes = 2 * (IMAGE_SIZE * H1_PAD + H1_PAD * H2_PAD + H2_PAD * OUT_PAD) \
        + 4 * 3 * H1_PAD
    cost = pl.CostEstimate(
        flops=2 * B * (IMAGE_SIZE * H1_PAD + H1_PAD * H2_PAD + H2_PAD * OUT_PAD),
        transcendentals=B * (OUT_PAD + 1),
        bytes_accessed=B * IMAGE_SIZE * 4 + weight_bytes + B * LABELS_COUNT * 4,
    )

    return pl.pallas_call(
        mlp_kernel,
        out_shape=jax.ShapeDtypeStruct((B, LABELS_COUNT), jnp.float32),
        grid=grid,
        in_specs=in_specs,
        out_specs=out_specs,
        compiler_params=pltpu.CompilerParams(
            dimension_semantics=("parallel",),
        ),
        cost_estimate=cost,
    )(x2d, w0, b_all, w1, w2)


def init_params(key):
    """PyTorch nn.Linear-style init (U[-1/sqrt(fan_in), +]), then padded:
    weights stored transposed (in, out), output dims zero-padded to 128, bf16;
    biases packed into one (3,128) f32 array (b2's padded lanes get -1e30)."""

    def linear(k, fan_in, fan_out):
        kw, kb = jax.random.split(k)
        bound = 1.0 / jnp.sqrt(fan_in)
        w = jax.random.uniform(kw, (fan_in, fan_out), jnp.float32, -bound, bound)
        b = jax.random.uniform(kb, (fan_out,), jnp.float32, -bound, bound)
        return w, b

    k0, k1, k2 = jax.random.split(key, 3)
    w0, b0 = linear(k0, IMAGE_SIZE, HID1)
    w1, b1 = linear(k1, HID1, HID2)
    w2, b2 = linear(k2, HID2, LABELS_COUNT)

    def pad_w(w, k_pad, n_pad):
        ki, no = w.shape
        return jnp.pad(w, ((0, k_pad - ki), (0, n_pad - no))).astype(jnp.bfloat16)

    def pad_vec(b, n_pad, fill):
        return jnp.pad(b, (0, n_pad - b.shape[0]), constant_values=fill)

    w0p = pad_w(w0, IMAGE_SIZE, H1_PAD)    # (784, 128) — K left unpadded
    w1p = pad_w(w1, H1_PAD, H2_PAD)        # (128, 128)
    w2p = pad_w(w2, H2_PAD, OUT_PAD)       # (128, 128)
    b_all = jnp.stack([
        pad_vec(b0, H1_PAD, 0.0),
        pad_vec(b1, H2_PAD, 0.0),
        pad_vec(b2, OUT_PAD, NEG_BIG),     # padded logit lanes -> exp() == 0
    ]).astype(jnp.float32)                 # (3, 128)

    return (w0p, b_all, w1p, w2p), (w0, b0, w1, b1, w2, b2)


def reference_forward(x, raw_params):
    """Pure-JAX f32 reference of the PyTorch forward (for sanity checking)."""
    w0, b0, w1, b1, w2, b2 = raw_params
    x2d = x.reshape(-1, IMAGE_SIZE).astype(jnp.float32)
    h0 = jnp.maximum(x2d @ w0 + b0, 0.0)
    h1 = jnp.maximum(h0 @ w1 + b1, 0.0)
    logits = h1 @ w2 + b2
    return jax.nn.log_softmax(logits, axis=-1)


if __name__ == "__main__":
    key = jax.random.PRNGKey(0)
    kx, kp = jax.random.split(key)

    # Small MNIST-like batch: (2, 1, 28, 28) -> view(-1, 784) inside forward.
    x = jax.random.normal(kx, (2, 1, 28, 28), jnp.float32)
    params, raw_params = init_params(kp)

    out = model_a_forward(x, params)
    jax.block_until_ready(out)

    assert out.shape == (2, LABELS_COUNT)
    # Rows of log_softmax exponentiate to a probability simplex.
    row_sums = jnp.sum(jnp.exp(out), axis=-1)
    assert jnp.allclose(row_sums, 1.0, atol=1e-4), row_sums
    # Matches the f32 reference (loose tolerance: bf16 weights/activations).
    ref = reference_forward(x, raw_params)
    assert jnp.allclose(out, ref, atol=1e-1), jnp.max(jnp.abs(out - ref))

    print("KERNEL_OK")
</pallas_src>

<mosaic_0001>
module attributes {stable_mosaic.version = 11 : i64} {
  func.func @mlp_kernel(%arg0: i32, %arg1: memref<2x784xf32, #tpu.memory_space<vmem>>, %arg2: memref<784x128xbf16, #tpu.memory_space<vmem>>, %arg3: memref<3x128xf32, #tpu.memory_space<vmem>>, %arg4: memref<128x128xbf16, #tpu.memory_space<vmem>>, %arg5: memref<128x128xbf16, #tpu.memory_space<vmem>>, %arg6: memref<2x10xf32, #tpu.memory_space<vmem>>) attributes {dimension_semantics = [#tpu.dimension_semantics<parallel>], iteration_bounds = array<i64: 1>, scalar_prefetch = 0 : i64, scratch_operands = 0 : i64, tpu.core_type = #tpu.core_type<tc>, window_params = [{transform_indices = @transform_0, window_bounds = array<i64: 2, 784>}, {pipeline_mode = #tpu.pipeline_mode<synchronous>, transform_indices = @transform_1, window_bounds = array<i64: 784, 128>}, {pipeline_mode = #tpu.pipeline_mode<synchronous>, transform_indices = @transform_2, window_bounds = array<i64: 3, 128>}, {pipeline_mode = #tpu.pipeline_mode<synchronous>, transform_indices = @transform_3, window_bounds = array<i64: 128, 128>}, {pipeline_mode = #tpu.pipeline_mode<synchronous>, transform_indices = @transform_4, window_bounds = array<i64: 128, 128>}, {transform_indices = @transform_5, window_bounds = array<i64: 2, 10>}]} {
    %c0 = arith.constant 0 : index
    %c0_0 = arith.constant 0 : index
    %0 = vector.load %arg3[%c0, %c0_0] : memref<3x128xf32, #tpu.memory_space<vmem>>, vector<3x128xf32>
    %c0_1 = arith.constant 0 : index
    %c0_2 = arith.constant 0 : index
    %1 = vector.load %arg1[%c0_1, %c0_2] : memref<2x784xf32, #tpu.memory_space<vmem>>, vector<2x784xf32>
    %2 = arith.truncf %1 : vector<2x784xf32> to vector<2x784xbf16>
    %c0_3 = arith.constant 0 : index
    %c0_4 = arith.constant 0 : index
    %3 = vector.load %arg2[%c0_3, %c0_4] : memref<784x128xbf16, #tpu.memory_space<vmem>>, vector<784x128xbf16>
    %cst = arith.constant dense<0.000000e+00> : vector<2x128xf32>
    %4 = tpu.matmul %2, %3, %cst {dimension_numbers = #tpu.dot_dimension_numbers<[1], [0], [0], [1], [0, 0, 1, 1], [], []>} : vector<2x784xbf16>, vector<784x128xbf16>, vector<2x128xf32> -> vector<2x128xf32>
    %5 = vector.extract_strided_slice %0 {offsets = [0, 0], sizes = [1, 128], strides = [1, 1]} : vector<3x128xf32> to vector<1x128xf32>
    %6 = vector.broadcast %5 : vector<1x128xf32> to vector<2x128xf32>
    %7 = arith.addf %4, %6 : vector<2x128xf32>
    %cst_5 = arith.constant 0.000000e+00 : f32
    %8 = vector.broadcast %cst_5 : f32 to vector<2x128xf32>
    %9 = arith.maximumf %7, %8 : vector<2x128xf32>
    %10 = arith.truncf %9 : vector<2x128xf32> to vector<2x128xbf16>
    %c0_6 = arith.constant 0 : index
    %c0_7 = arith.constant 0 : index
    %11 = vector.load %arg4[%c0_6, %c0_7] : memref<128x128xbf16, #tpu.memory_space<vmem>>, vector<128x128xbf16>
    %cst_8 = arith.constant dense<0.000000e+00> : vector<2x128xf32>
    %12 = tpu.matmul %10, %11, %cst_8 {dimension_numbers = #tpu.dot_dimension_numbers<[1], [0], [0], [1], [0, 0, 1, 1], [], []>} : vector<2x128xbf16>, vector<128x128xbf16>, vector<2x128xf32> -> vector<2x128xf32>
    %13 = vector.extract_strided_slice %0 {offsets = [1, 0], sizes = [1, 128], strides = [1, 1]} : vector<3x128xf32> to vector<1x128xf32>
    %14 = vector.broadcast %13 : vector<1x128xf32> to vector<2x128xf32>
    %15 = arith.addf %12, %14 : vector<2x128xf32>
    %cst_9 = arith.constant 0.000000e+00 : f32
    %16 = vector.broadcast %cst_9 : f32 to vector<2x128xf32>
    %17 = arith.maximumf %15, %16 : vector<2x128xf32>
    %18 = arith.truncf %17 : vector<2x128xf32> to vector<2x128xbf16>
    %c0_10 = arith.constant 0 : index
    %c0_11 = arith.constant 0 : index
    %19 = vector.load %arg5[%c0_10, %c0_11] : memref<128x128xbf16, #tpu.memory_space<vmem>>, vector<128x128xbf16>
    %cst_12 = arith.constant dense<0.000000e+00> : vector<2x128xf32>
    %20 = tpu.matmul %18, %19, %cst_12 {dimension_numbers = #tpu.dot_dimension_numbers<[1], [0], [0], [1], [0, 0, 1, 1], [], []>} : vector<2x128xbf16>, vector<128x128xbf16>, vector<2x128xf32> -> vector<2x128xf32>
    %21 = vector.extract_strided_slice %0 {offsets = [2, 0], sizes = [1, 128], strides = [1, 1]} : vector<3x128xf32> to vector<1x128xf32>
    %22 = vector.broadcast %21 : vector<1x128xf32> to vector<2x128xf32>
    %23 = arith.addf %20, %22 : vector<2x128xf32>
    %cst_13 = arith.constant dense<0xFF800000> : vector<2xf32>
    %24 = vector.multi_reduction <maximumf>, %23, %cst_13 [1] : vector<2x128xf32> to vector<2xf32>
    %25 = vector.shape_cast %24 : vector<2xf32> to vector<2x1xf32>
    %26 = vector.broadcast %25 : vector<2x1xf32> to vector<2x128xf32>
    %27 = arith.subf %23, %26 : vector<2x128xf32>
    %28 = math.exp %27 : vector<2x128xf32>
    %cst_14 = arith.constant dense<0.000000e+00> : vector<2xf32>
    %29 = vector.multi_reduction <add>, %28, %cst_14 [1] : vector<2x128xf32> to vector<2xf32>
    %30 = vector.shape_cast %29 : vector<2xf32> to vector<2x1xf32>
    %31 = math.log %30 : vector<2x1xf32>
    %32 = vector.broadcast %31 : vector<2x1xf32> to vector<2x128xf32>
    %33 = arith.subf %27, %32 : vector<2x128xf32>
    %34 = vector.extract_strided_slice %33 {offsets = [0, 0], sizes = [2, 10], strides = [1, 1]} : vector<2x128xf32> to vector<2x10xf32>
    %c0_15 = arith.constant 0 : index
    %c0_16 = arith.constant 0 : index
    %35 = vector.load %arg6[%c0_15, %c0_16] : memref<2x10xf32, #tpu.memory_space<vmem>>, vector<2x10xf32>
    tpu.vector_store %arg6[%c0_15, %c0_16], %34 {strides = array<i32>} : memref<2x10xf32, #tpu.memory_space<vmem>>, vector<2x10xf32>,
    return
  }
  func.func @transform_0(%arg0: i32) -> (i32, i32) {
    %c0_i32 = arith.constant 0 : i32
    %c0_i32_0 = arith.constant 0 : i32
    return %arg0, %c0_i32 : i32, i32
  }
  func.func @transform_1(%arg0: i32) -> (i32, i32) {
    %c0_i32 = arith.constant 0 : i32
    %c0_i32_0 = arith.constant 0 : i32
    %c0_i32_1 = arith.constant 0 : i32
    return %c0_i32, %c0_i32_0 : i32, i32
  }
  func.func @transform_2(%arg0: i32) -> (i32, i32) {
    %c0_i32 = arith.constant 0 : i32
    %c0_i32_0 = arith.constant 0 : i32
    %c0_i32_1 = arith.constant 0 : i32
    return %c0_i32, %c0_i32_0 : i32, i32
  }
  func.func @transform_3(%arg0: i32) -> (i32, i32) {
    %c0_i32 = arith.constant 0 : i32
    %c0_i32_0 = arith.constant 0 : i32
    %c0_i32_1 = arith.constant 0 : i32
    return %c0_i32, %c0_i32_0 : i32, i32
  }
  func.func @transform_4(%arg0: i32) -> (i32, i32) {
    %c0_i32 = arith.constant 0 : i32
    %c0_i32_0 = arith.constant 0 : i32
    %c0_i32_1 = arith.constant 0 : i32
    return %c0_i32, %c0_i32_0 : i32, i32
  }
  func.func @transform_5(%arg0: i32) -> (i32, i32) {
    %c0_i32 = arith.constant 0 : i32
    %c0_i32_0 = arith.constant 0 : i32
    return %arg0, %c0_i32 : i32, i32
  }
}

</mosaic_0001>

<llo_original>
// kernel: tpu_custom_call.1
$region0: #{tpu_custom_call.1}
  #allocation0 [shape = 'u32[]', space=smem, size = 0x4, offset = 0x4, fixed_abs, tag = 'smem constant byte address 0x4 - core index']
  #allocation1 [shape = 'u32[72,128]{1,0:T(1,128)}', space=vmem, size = 0x9000, scoped, tag = 'internal scratch']
  %s0 = inlined_call_operand.hbm [shape: f32[2,784], index: 0, kind: input, shape index: {}]
  %s1 = inlined_call_operand.hbm [shape: bf16[784,128], index: 1, kind: input, shape index: {}]
  %s2 = inlined_call_operand.hbm [shape: f32[3,128], index: 2, kind: input, shape index: {}]
  %s3 = inlined_call_operand.hbm [shape: bf16[128,128], index: 3, kind: input, shape index: {}]
  %s4 = inlined_call_operand.hbm [shape: bf16[128,128], index: 4, kind: input, shape index: {}]
  %s5 = inlined_call_operand.hbm [shape: f32[2,10], index: 5, kind: output, shape index: {}]
  %s6 = sld [smem:[#allocation0]]
  $region50: #{tpu_custom_call.1} parent=0
    _
  %s8 = ssub.s32 1, %s6
  %s9 = scalar_select 0, %s8, %s6
  $region1: #{tpu_custom_call.1} parent=0
    #allocation2 [shape = 'u8[7168]{0}', space=vmem, size = 0x1c00, scoped, tag = 'input window, operand 0, single buffered']
    #allocation3 [shape = 's32[1]{0}', space=sflag, size = 0x4, scoped, tag = 'scoped memory for tpu_custom_call.1']
    #allocation4 [shape = 's32[1]{0}', space=sflag, size = 0x4, scoped, tag = 'scoped memory for tpu_custom_call.1']
    #allocation5 [shape = 'u8[200704]{0}', space=vmem, size = 0x31000, scoped, tag = 'input window, operand 1, single buffered']
    #allocation6 [shape = 's32[1]{0}', space=sflag, size = 0x4, scoped, tag = 'scoped memory for tpu_custom_call.1']
    #allocation7 [shape = 'u8[2048]{0}', space=vmem, size = 0x800, scoped, tag = 'input window, operand 2, single buffered']
    #allocation8 [shape = 'u8[32768]{0}', space=vmem, size = 0x8000, scoped, tag = 'input window, operand 3, single buffered']
    #allocation9 [shape = 's32[1]{0}', space=sflag, size = 0x4, scoped, tag = 'scoped memory for tpu_custom_call.1']
    #allocation10 [shape = 'u8[32768]{0}', space=vmem, size = 0x8000, scoped, tag = 'input window, operand 4, single buffered']
    #allocation11 [shape = 'u8[1024]{0}', space=vmem, size = 0x400, scoped, tag = 'output window, operand 0, single buffered']
    %10 = vsyncpa [#allocation3], 0
    %11 = vsyncpa [#allocation6], 0
    %12 = vsyncpa [#allocation9], 0
    %13 = vsyncpa [#allocation4], 0
    // Predicated region
    $region2: #{tpu_custom_call.1} parent=1 // pred_check
      _
    $region3: #{tpu_custom_call.1} parent=1 // pred_check_branch
      %15 = sbr.rel (0) target = $region5
    $region4: #{tpu_custom_call.1} parent=1 // pred_region
      %17 = vsyncadd [#allocation3], 0
      %s19 = sshll.u32 %s0, 4
      %s20 = int_to_ptr.hbm [resolvable:$true] %s19
      %s21 = sshll.u32 [#allocation2], 4
      %s22 = int_to_ptr.vmem [resolvable:$true] %s21
      %24 = dma.hbm_to_vmem [thread:$0]  %s20, 224, %s22, [#allocation3]
    $region5: #{tpu_custom_call.1} parent=1 // pred_fallthru
      _
    // Predicated region
    $region6: #{tpu_custom_call.1} parent=1 // pred_check
      _
    $region7: #{tpu_custom_call.1} parent=1 // pred_check_branch
      %26 = sbr.rel (0) target = $region9
    $region8: #{tpu_custom_call.1} parent=1 // pred_region
      %28 = vsyncadd [#allocation6], 0
      %s29 = sshll.u32 %s1, 4
      %s30 = int_to_ptr.hbm [resolvable:$true] %s29
      %s31 = sshll.u32 [#allocation5], 4
      %s32 = int_to_ptr.vmem [resolvable:$true] %s31
      %37 = dma.hbm_to_vmem [thread:$0]  %s30, 6272, %s32, [#allocation6], 64, 64, 4
    $region9: #{tpu_custom_call.1} parent=1 // pred_fallthru
      _
    // Predicated region
    $region10: #{tpu_custom_call.1} parent=1 // pred_check
      _
    $region11: #{tpu_custom_call.1} parent=1 // pred_check_branch
      %39 = sbr.rel (0) target = $region13
    $region12: #{tpu_custom_call.1} parent=1 // pred_region
      %41 = vsyncadd [#allocation6], 0
      %s43 = sshll.u32 %s2, 4
      %s44 = int_to_ptr.hbm [resolvable:$true] %s43
      %s45 = sshll.u32 [#allocation7], 4
      %s46 = int_to_ptr.vmem [resolvable:$true] %s45
      %48 = dma.hbm_to_vmem [thread:$0]  %s44, 64, %s46, [#allocation6]
    $region13: #{tpu_custom_call.1} parent=1 // pred_fallthru
      _
    // Predicated region
    $region14: #{tpu_custom_call.1} parent=1 // pred_check
      _
    $region15: #{tpu_custom_call.1} parent=1 // pred_check_branch
      %50 = sbr.rel (0) target = $region17
    $region16: #{tpu_custom_call.1} parent=1 // pred_region
      %52 = vsyncadd [#allocation9], 0
      %s53 = sshll.u32 %s3, 4
      %s54 = int_to_ptr.hbm [resolvable:$true] %s53
      %s55 = sshll.u32 [#allocation8], 4
      %s56 = int_to_ptr.vmem [resolvable:$true] %s55
      %61 = dma.hbm_to_vmem [thread:$0]  %s54, 1024, %s56, [#allocation9], 64, 64, 4
    $region17: #{tpu_custom_call.1} parent=1 // pred_fallthru
      _
    // Predicated region
    $region18: #{tpu_custom_call.1} parent=1 // pred_check
      _
    $region19: #{tpu_custom_call.1} parent=1 // pred_check_branch
      %63 = sbr.rel (0) target = $region21
    $region20: #{tpu_custom_call.1} parent=1 // pred_region
      %65 = vsyncadd [#allocation9], 0
      %s66 = sshll.u32 %s4, 4
      %s67 = int_to_ptr.hbm [resolvable:$true] %s66
      %s68 = sshll.u32 [#allocation10], 4
      %s69 = int_to_ptr.vmem [resolvable:$true] %s68
      %74 = dma.hbm_to_vmem [thread:$0]  %s67, 1024, %s69, [#allocation9], 64, 64, 4
    $region21: #{tpu_custom_call.1} parent=1 // pred_fallthru
      _
    // Predicated region
    $region22: #{tpu_custom_call.1} parent=1 // pred_check
      _
    $region23: #{tpu_custom_call.1} parent=1 // pred_check_branch
      %76 = sbr.rel (0) target = $region25
    $region24: #{tpu_custom_call.1} parent=1 // pred_region
      %78 = dma.done [#allocation3], 224
    $region25: #{tpu_custom_call.1} parent=1 // pred_fallthru
      _
    // Predicated region
    $region26: #{tpu_custom_call.1} parent=1 // pred_check
      _
    $region27: #{tpu_custom_call.1} parent=1 // pred_check_branch
      %80 = sbr.rel (0) target = $region29
    $region28: #{tpu_custom_call.1} parent=1 // pred_region
      %82 = dma.done [#allocation6], 6272
    $region29: #{tpu_custom_call.1} parent=1 // pred_fallthru
      _
    // Predicated region
    $region30: #{tpu_custom_call.1} parent=1 // pred_check
      _
    $region31: #{tpu_custom_call.1} parent=1 // pred_check_branch
      %84 = sbr.rel (0) target = $region33
    $region32: #{tpu_custom_call.1} parent=1 // pred_region
      %86 = dma.done [#allocation6], 64
    $region33: #{tpu_custom_call.1} parent=1 // pred_fallthru
      _
    // Predicated region
    $region34: #{tpu_custom_call.1} parent=1 // pred_check
      _
    $region35: #{tpu_custom_call.1} parent=1 // pred_check_branch
      %88 = sbr.rel (0) target = $region37
    $region36: #{tpu_custom_call.1} parent=1 // pred_region
      %90 = dma.done [#allocation9], 1024
    $region37: #{tpu_custom_call.1} parent=1 // pred_fallthru
      _
    // Predicated region
    $region38: #{tpu_custom_call.1} parent=1 // pred_check
      _
    $region39: #{tpu_custom_call.1} parent=1 // pred_check_branch
      %92 = sbr.rel (0) target = $region41
    $region40: #{tpu_custom_call.1} parent=1 // pred_region
      %94 = dma.done [#allocation9], 1024
    $region41: #{tpu_custom_call.1} parent=1 // pred_fallthru
      _
    %v96 = vld [vmem:[#allocation7] sm:$0x7]
    %v97 = vld [vmem:[#allocation2] sm:$0xff]
    %v98 = vld [vmem:[#allocation2 + $0x8] sm:$0x3f]
    %101 = vst [vmem:[#allocation1] ss:$4 sm:$0xff] %v97
    %s102 = scalar_lea.vmem [#allocation1], 32
    %103 = vst [vmem:[%s102] ss:$4 sm:$0xff] %v98
    %v104 = vld.sshfl [vmem:[#allocation1] sm:$0xff pattern:$0x73625140]
    %v105 = vld.sshfl [vmem:[#allocation1 + $0x8] sm:$0xff pattern:$0x73625140]
    %v106 = vld.sshfl [vmem:[#allocation1 + $0x10] sm:$0xff pattern:$0x73625140]
    %v107 = vld.sshfl [vmem:[#allocation1 + $0x18] sm:$0xff pattern:$0x73625140]
    %v108 = vld.sshfl [vmem:[#allocation1 + $0x20] sm:$0xff pattern:$0x73625140]
    %v109 = vld.sshfl [vmem:[#allocation1 + $0x28] sm:$0xff pattern:$0x73625140]
    %v110 = vld.sshfl [vmem:[#allocation1 + $0x30] sm:$0xff pattern:$0x73625140]
    %v118 = vpack.c.bf16 %v104, %v104
    %v119 = vpack.c.bf16 %v105, %v105
    %v120 = vpack.c.bf16 %v106, %v106
    %v121 = vpack.c.bf16 %v107, %v107
    %v122 = vpack.c.bf16 %v108, %v108
    %v123 = vpack.c.bf16 %v109, %v109
    %v124 = vpack.c.bf16 %v110, %v110
    %v125 = vld [vmem:[#allocation5] sm:$0xf]
    %v126 = vld [vmem:[#allocation5 + $0x4] sm:$0xf]
    %v127 = vld [vmem:[#allocation5 + $0x8] sm:$0xf]
    %v128 = vld [vmem:[#allocation5 + $0xc] sm:$0xf]
    %v129 = vld [vmem:[#allocation5 + $0x10] sm:$0xf]
    %v130 = vld [vmem:[#allocation5 + $0x14] sm:$0xf]
    %v131 = vld [vmem:[#allocation5 + $0x18] sm:$0xf]
    %v132 = vld [vmem:[#allocation5 + $0x1c] sm:$0xf]
    %v133 = vld [vmem:[#allocation5 + $0x20] sm:$0xf]
    %v134 = vld [vmem:[#allocation5 + $0x24] sm:$0xf]
    %v135 = vld [vmem:[#allocation5 + $0x28] sm:$0xf]
    %v136 = vld [vmem:[#allocation5 + $0x2c] sm:$0xf]
    %v137 = vld [vmem:[#allocation5 + $0x30] sm:$0xf]
    %v138 = vld [vmem:[#allocation5 + $0x34] sm:$0xf]
    %v139 = vld [vmem:[#allocation5 + $0x38] sm:$0xf]
    %v140 = vld [vmem:[#allocation5 + $0x3c] sm:$0xf]
    %v141 = vld [vmem:[#allocation5 + $0x40] sm:$0xf]
    %v142 = vld [vmem:[#allocation5 + $0x44] sm:$0xf]
    %v143 = vld [vmem:[#allocation5 + $0x48] sm:$0xf]
    %v144 = vld [vmem:[#allocation5 + $0x4c] sm:$0xf]
    %v145 = vld [vmem:[#allocation5 + $0x50] sm:$0xf]
    %v146 = vld [vmem:[#allocation5 + $0x54] sm:$0xf]
    %v147 = vld [vmem:[#allocation5 + $0x58] sm:$0xf]
    %v148 = vld [vmem:[#allocation5 + $0x5c] sm:$0xf]
    %v149 = vld [vmem:[#allocation5 + $0x60] sm:$0xf]
    %v150 = vld [vmem:[#allocation5 + $0x64] sm:$0xf]
    %v151 = vld [vmem:[#allocation5 + $0x68] sm:$0xf]
    %v152 = vld [vmem:[#allocation5 + $0x6c] sm:$0xf]
    %v153 = vld [vmem:[#allocation5 + $0x70] sm:$0xf]
    %v154 = vld [vmem:[#allocation5 + $0x74] sm:$0xf]
    %v155 = vld [vmem:[#allocation5 + $0x78] sm:$0xf]
    %v156 = vld [vmem:[#allocation5 + $0x7c] sm:$0xf]
    %v157 = vld [vmem:[#allocation5 + $0x80] sm:$0xf]
    %v158 = vld [vmem:[#allocation5 + $0x84] sm:$0xf]
    %v159 = vld [vmem:[#allocation5 + $0x88] sm:$0xf]
    %v160 = vld [vmem:[#allocation5 + $0x8c] sm:$0xf]
    %v161 = vld [vmem:[#allocation5 + $0x90] sm:$0xf]
    %v162 = vld [vmem:[#allocation5 + $0x94] sm:$0xf]
    %v163 = vld [vmem:[#allocation5 + $0x98] sm:$0xf]
    %v164 = vld [vmem:[#allocation5 + $0x9c] sm:$0xf]
    %v165 = vld [vmem:[#allocation5 + $0xa0] sm:$0xf]
    %v166 = vld [vmem:[#allocation5 + $0xa4] sm:$0xf]
    %v167 = vld [vmem:[#allocation5 + $0xa8] sm:$0xf]
    %v168 = vld [vmem:[#allocation5 + $0xac] sm:$0xf]
    %v169 = vld [vmem:[#allocation5 + $0xb0] sm:$0xf]
    %v170 = vld [vmem:[#allocation5 + $0xb4] sm:$0xf]
    %v171 = vld [vmem:[#allocation5 + $0xb8] sm:$0xf]
    %v172 = vld [vmem:[#allocation5 + $0xbc] sm:$0xf]
    %v173 = vld [vmem:[#allocation5 + $0xc0] sm:$0xf]
    %v174 = vld [vmem:[#allocation5 + $0xc4] sm:$0xf]
    %v175 = vld [vmem:[#allocation5 + $0xc8] sm:$0xf]
    %v176 = vld [vmem:[#allocation5 + $0xcc] sm:$0xf]
    %v177 = vld [vmem:[#allocation5 + $0xd0] sm:$0xf]
    %v178 = vld [vmem:[#allocation5 + $0xd4] sm:$0xf]
    %v179 = vld [vmem:[#allocation5 + $0xd8] sm:$0xf]
    %v180 = vld [vmem:[#allocation5 + $0xdc] sm:$0xf]
    %v181 = vld [vmem:[#allocation5 + $0xe0] sm:$0xf]
    %v182 = vld [vmem:[#allocation5 + $0xe4] sm:$0xf]
    %v183 = vld [vmem:[#allocation5 + $0xe8] sm:$0xf]
    %v184 = vld [vmem:[#allocation5 + $0xec] sm:$0xf]
    %v185 = vld [vmem:[#allocation5 + $0xf0] sm:$0xf]
    %v186 = vld [vmem:[#allocation5 + $0xf4] sm:$0xf]
    %v187 = vld [vmem:[#allocation5 + $0xf8] sm:$0xf]
    %v188 = vld [vmem:[#allocation5 + $0xfc] sm:$0xf]
    %v189 = vld [vmem:[#allocation5 + $0x100] sm:$0xf]
    %v190 = vld [vmem:[#allocation5 + $0x104] sm:$0xf]
    %v191 = vld [vmem:[#allocation5 + $0x108] sm:$0xf]
    %v192 = vld [vmem:[#allocation5 + $0x10c] sm:$0xf]
    %v193 = vld [vmem:[#allocation5 + $0x110] sm:$0xf]
    %v194 = vld [vmem:[#allocation5 + $0x114] sm:$0xf]
    %v195 = vld [vmem:[#allocation5 + $0x118] sm:$0xf]
    %v196 = vld [vmem:[#allocation5 + $0x11c] sm:$0xf]
    %v197 = vld [vmem:[#allocation5 + $0x120] sm:$0xf]
    %v198 = vld [vmem:[#allocation5 + $0x124] sm:$0xf]
    %v199 = vld [vmem:[#allocation5 + $0x128] sm:$0xf]
    %v200 = vld [vmem:[#allocation5 + $0x12c] sm:$0xf]
    %v201 = vld [vmem:[#allocation5 + $0x130] sm:$0xf]
    %v202 = vld [vmem:[#allocation5 + $0x134] sm:$0xf]
    %v203 = vld [vmem:[#allocation5 + $0x138] sm:$0xf]
    %v204 = vld [vmem:[#allocation5 + $0x13c] sm:$0xf]
    %v205 = vld [vmem:[#allocation5 + $0x140] sm:$0xf]
    %v206 = vld [vmem:[#allocation5 + $0x144] sm:$0xf]
    %v207 = vld [vmem:[#allocation5 + $0x148] sm:$0xf]
    %v208 = vld [vmem:[#allocation5 + $0x14c] sm:$0xf]
    %v209 = vld [vmem:[#allocation5 + $0x150] sm:$0xf]
    %v210 = vld [vmem:[#allocation5 + $0x154] sm:$0xf]
    %v211 = vld [vmem:[#allocation5 + $0x158] sm:$0xf]
    %v212 = vld [vmem:[#allocation5 + $0x15c] sm:$0xf]
    %v213 = vld [vmem:[#allocation5 + $0x160] sm:$0xf]
    %v214 = vld [vmem:[#allocation5 + $0x164] sm:$0xf]
    %v215 = vld [vmem:[#allocation5 + $0x168] sm:$0xf]
    %v216 = vld [vmem:[#allocation5 + $0x16c] sm:$0xf]
    %v217 = vld [vmem:[#allocation5 + $0x170] sm:$0xf]
    %v218 = vld [vmem:[#allocation5 + $0x174] sm:$0xf]
    %v219 = vld [vmem:[#allocation5 + $0x178] sm:$0xf]
    %v220 = vld [vmem:[#allocation5 + $0x17c] sm:$0xf]
    %v221 = vld [vmem:[#allocation5 + $0x180] sm:$0xf]
    %v222 = vld [vmem:[#allocation5 + $0x184] sm:$0xf]
    %v223 = vperm.slane %v96, 0
    %v322 = vunpack.c.l.b16 %v125
    %v323 = vunpack.c.l.b16 %v126
    %v324 = vunpack.c.l.b16 %v127
    %v325 = vunpack.c.l.b16 %v128
    %v326 = vunpack.c.l.b16 %v129
    %v327 = vunpack.c.l.b16 %v130
    %v328 = vunpack.c.l.b16 %v131
    %v329 = vunpack.c.l.b16 %v132
    %v330 = vunpack.c.l.b16 %v133
    %v331 = vunpack.c.l.b16 %v134
    %v332 = vunpack.c.l.b16 %v135
    %v333 = vunpack.c.l.b16 %v136
    %v334 = vunpack.c.l.b16 %v137
    %v335 = vunpack.c.l.b16 %v138
    %v336 = vunpack.c.l.b16 %v139
    %v337 = vunpack.c.l.b16 %v140
    %v338 = vunpack.c.l.b16 %v141
    %v339 = vunpack.c.l.b16 %v142
    %v340 = vunpack.c.l.b16 %v143
    %v341 = vunpack.c.l.b16 %v144
    %v342 = vunpack.c.l.b16 %v145
    %v343 = vunpack.c.l.b16 %v146
    %v344 = vunpack.c.l.b16 %v147
    %v345 = vunpack.c.l.b16 %v148
    %v346 = vunpack.c.l.b16 %v149
    %v347 = vunpack.c.l.b16 %v150
    %v348 = vunpack.c.l.b16 %v151
    %v349 = vunpack.c.l.b16 %v152
    %v350 = vunpack.c.l.b16 %v153
    %v351 = vunpack.c.l.b16 %v154
    %v352 = vunpack.c.l.b16 %v155
    %v353 = vunpack.c.l.b16 %v156
    %v354 = vunpack.c.l.b16 %v157
    %v355 = vunpack.c.l.b16 %v158
    %v356 = vunpack.c.l.b16 %v159
    %v357 = vunpack.c.l.b16 %v160
    %v358 = vunpack.c.l.b16 %v161
    %v359 = vunpack.c.l.b16 %v162
    %v360 = vunpack.c.l.b16 %v163
    %v361 = vunpack.c.l.b16 %v164
    %v362 = vunpack.c.l.b16 %v165
    %v363 = vunpack.c.l.b16 %v166
    %v364 = vunpack.c.l.b16 %v167
    %v365 = vunpack.c.l.b16 %v168
    %v366 = vunpack.c.l.b16 %v169
    %v367 = vunpack.c.l.b16 %v170
    %v368 = vunpack.c.l.b16 %v171
    %v369 = vunpack.c.l.b16 %v172
    %v370 = vunpack.c.l.b16 %v173
    %v371 = vunpack.c.l.b16 %v174
    %v372 = vunpack.c.l.b16 %v175
    %v373 = vunpack.c.l.b16 %v176
    %v374 = vunpack.c.l.b16 %v177
    %v375 = vunpack.c.l.b16 %v178
    %v376 = vunpack.c.l.b16 %v179
    %v377 = vunpack.c.l.b16 %v180
    %v378 = vunpack.c.l.b16 %v181
    %v379 = vunpack.c.l.b16 %v182
    %v380 = vunpack.c.l.b16 %v183
    %v381 = vunpack.c.l.b16 %v184
    %v382 = vunpack.c.l.b16 %v185
    %v383 = vunpack.c.l.b16 %v186
    %v384 = vunpack.c.l.b16 %v187
    %v385 = vunpack.c.l.b16 %v188
    %v386 = vunpack.c.l.b16 %v189
    %v387 = vunpack.c.l.b16 %v190
    %v388 = vunpack.c.l.b16 %v191
    %v389 = vunpack.c.l.b16 %v192
    %v390 = vunpack.c.l.b16 %v193
    %v391 = vunpack.c.l.b16 %v194
    %v392 = vunpack.c.l.b16 %v195
    %v393 = vunpack.c.l.b16 %v196
    %v394 = vunpack.c.l.b16 %v197
    %v395 = vunpack.c.l.b16 %v198
    %v396 = vunpack.c.l.b16 %v199
    %v397 = vunpack.c.l.b16 %v200
    %v398 = vunpack.c.l.b16 %v201
    %v399 = vunpack.c.l.b16 %v202
    %v400 = vunpack.c.l.b16 %v203
    %v401 = vunpack.c.l.b16 %v204
    %v402 = vunpack.c.l.b16 %v205
    %v403 = vunpack.c.l.b16 %v206
    %v404 = vunpack.c.l.b16 %v207
    %v405 = vunpack.c.l.b16 %v208
    %v406 = vunpack.c.l.b16 %v209
    %v407 = vunpack.c.l.b16 %v210
    %v408 = vunpack.c.l.b16 %v211
    %v409 = vunpack.c.l.b16 %v212
    %v410 = vunpack.c.l.b16 %v213
    %v411 = vunpack.c.l.b16 %v214
    %v412 = vunpack.c.l.b16 %v215
    %v413 = vunpack.c.l.b16 %v216
    %v414 = vunpack.c.l.b16 %v217
    %v415 = vunpack.c.l.b16 %v218
    %v416 = vunpack.c.l.b16 %v219
    %v417 = vunpack.c.l.b16 %v220
    %v418 = vunpack.c.l.b16 %v221
    %v419 = vunpack.c.l.b16 %v222
    %v420 = vpack.c.b16 %v323, %v322
    %v421 = vpack.c.b16 %v325, %v324
    %v422 = vpack.c.b16 %v327, %v326
    %v423 = vpack.c.b16 %v329, %v328
    %v424 = vpack.c.b16 %v331, %v330
    %v425 = vpack.c.b16 %v333, %v332
    %v426 = vpack.c.b16 %v335, %v334
    %v427 = vpack.c.b16 %v337, %v336
    %v428 = vpack.c.b16 %v339, %v338
    %v429 = vpack.c.b16 %v341, %v340
    %v430 = vpack.c.b16 %v343, %v342
    %v431 = vpack.c.b16 %v345, %v344
    %v432 = vpack.c.b16 %v347, %v346
    %v433 = vpack.c.b16 %v349, %v348
    %v434 = vpack.c.b16 %v351, %v350
    %v435 = vpack.c.b16 %v353, %v352
    %v436 = vpack.c.b16 %v355, %v354
    %v437 = vpack.c.b16 %v357, %v356
    %v438 = vpack.c.b16 %v359, %v358
    %v439 = vpack.c.b16 %v361, %v360
    %v440 = vpack.c.b16 %v363, %v362
    %v441 = vpack.c.b16 %v365, %v364
    %v442 = vpack.c.b16 %v367, %v366
    %v443 = vpack.c.b16 %v369, %v368
    %v444 = vpack.c.b16 %v371, %v370
    %v445 = vpack.c.b16 %v373, %v372
    %v446 = vpack.c.b16 %v375, %v374
    %v447 = vpack.c.b16 %v377, %v376
    %v448 = vpack.c.b16 %v379, %v378
    %v449 = vpack.c.b16 %v381, %v380
    %v450 = vpack.c.b16 %v383, %v382
    %v451 = vpack.c.b16 %v385, %v384
    %v452 = vpack.c.b16 %v387, %v386
    %v453 = vpack.c.b16 %v389, %v388
    %v454 = vpack.c.b16 %v391, %v390
    %v455 = vpack.c.b16 %v393, %v392
    %v456 = vpack.c.b16 %v395, %v394
    %v457 = vpack.c.b16 %v397, %v396
    %v458 = vpack.c.b16 %v399, %v398
    %v459 = vpack.c.b16 %v401, %v400
    %v460 = vpack.c.b16 %v403, %v402
    %v461 = vpack.c.b16 %v405, %v404
    %v462 = vpack.c.b16 %v407, %v406
    %v463 = vpack.c.b16 %v409, %v408
    %v464 = vpack.c.b16 %v411, %v410
    %v465 = vpack.c.b16 %v413, %v412
    %v466 = vpack.c.b16 %v415, %v414
    %v467 = vpack.c.b16 %v417, %v416
    %v468 = vpack.c.b16 %v419, %v418
    %vm518 = vcmask 130048
    %v520 = vsel %vm518, %v124, 0
    %522 = vmatpush.bf16.msra.mxu0 %v427
    %523 = vmatpush.bf16.msra.mxu0 %v426
    %524 = vmatpush.bf16.msra.mxu0 %v425
    %525 = vmatpush.bf16.msra.mxu0 %v424
    %526 = vmatpush.bf16.msra.mxu0 %v423
    %527 = vmatpush.bf16.msra.mxu0 %v422
    %528 = vmatpush.bf16.msra.mxu0 %v421
    %529 = vmatpush.bf16.msra.mxu0 %v420
    %530 = vmatmul.bf16.gmra.mxu0 %v118
    %v531 = vpop.f32.mrf.mxu0
    %v532 = vadd.f32 %v223, %v531
    %v533 = vpop.f32.mrf.mxu0
    %534 = vdwg.mxu0
    %535 = vmatpush.bf16.msra.mxu0 %v435
    %536 = vmatpush.bf16.msra.mxu0 %v434
    %537 = vmatpush.bf16.msra.mxu0 %v433
    %538 = vmatpush.bf16.msra.mxu0 %v432
    %539 = vmatpush.bf16.msra.mxu0 %v431
    %540 = vmatpush.bf16.msra.mxu0 %v430
    %541 = vmatpush.bf16.msra.mxu0 %v429
    %542 = vmatpush.bf16.msra.mxu0 %v428
    %543 = vmatmul.bf16.gmra.mxu0 %v119
    %v544 = vpop.f32.mrf.mxu0
    %v545 = vadd.f32 %v532, %v544
    %v546 = vpop.f32.mrf.mxu0
    %547 = vdwg.mxu0
    %548 = vmatpush.bf16.msra.mxu0 %v443
    %549 = vmatpush.bf16.msra.mxu0 %v442
    %550 = vmatpush.bf16.msra.mxu0 %v441
    %551 = vmatpush.bf16.msra.mxu0 %v440
    %552 = vmatpush.bf16.msra.mxu0 %v439
    %553 = vmatpush.bf16.msra.mxu0 %v438
    %554 = vmatpush.bf16.msra.mxu0 %v437
    %555 = vmatpush.bf16.msra.mxu0 %v436
    %556 = vmatmul.bf16.gmra.mxu0 %v120
    %v557 = vpop.f32.mrf.mxu0
    %v558 = vadd.f32 %v545, %v557
    %v559 = vpop.f32.mrf.mxu0
    %560 = vdwg.mxu0
    %561 = vmatpush.bf16.msra.mxu0 %v451
    %562 = vmatpush.bf16.msra.mxu0 %v450
    %563 = vmatpush.bf16.msra.mxu0 %v449
    %564 = vmatpush.bf16.msra.mxu0 %v448
    %565 = vmatpush.bf16.msra.mxu0 %v447
    %566 = vmatpush.bf16.msra.mxu0 %v446
    %567 = vmatpush.bf16.msra.mxu0 %v445
    %568 = vmatpush.bf16.msra.mxu0 %v444
    %569 = vmatmul.bf16.gmra.mxu0 %v121
    %v570 = vpop.f32.mrf.mxu0
    %v571 = vadd.f32 %v558, %v570
    %v572 = vpop.f32.mrf.mxu0
    %573 = vdwg.mxu0
    %574 = vmatpush.bf16.msra.mxu0 %v459
    %575 = vmatpush.bf16.msra.mxu0 %v458
    %576 = vmatpush.bf16.msra.mxu0 %v457
    %577 = vmatpush.bf16.msra.mxu0 %v456
    %578 = vmatpush.bf16.msra.mxu0 %v455
    %579 = vmatpush.bf16.msra.mxu0 %v454
    %580 = vmatpush.bf16.msra.mxu0 %v453
    %581 = vmatpush.bf16.msra.mxu0 %v452
    %582 = vmatmul.bf16.gmra.mxu0 %v122
    %v583 = vpop.f32.mrf.mxu0
    %v584 = vadd.f32 %v571, %v583
    %v585 = vpop.f32.mrf.mxu0
    %586 = vdwg.mxu0
    %587 = vmatpush.bf16.msra.mxu0 %v467
    %588 = vmatpush.bf16.msra.mxu0 %v466
    %589 = vmatpush.bf16.msra.mxu0 %v465
    %590 = vmatpush.bf16.msra.mxu0 %v464
    %591 = vmatpush.bf16.msra.mxu0 %v463
    %592 = vmatpush.bf16.msra.mxu0 %v462
    %593 = vmatpush.bf16.msra.mxu0 %v461
    %594 = vmatpush.bf16.msra.mxu0 %v460
    %595 = vmatmul.bf16.gmra.mxu0 %v123
    %v596 = vpop.f32.mrf.mxu0
    %v597 = vadd.f32 %v584, %v596
    %v598 = vpop.f32.mrf.mxu0
    %599 = vdwg.mxu0
    %600 = vmatpush.bf16.msra.mxu0 0
    %601 = vmatpush.bf16.msra.mxu0 0
    %602 = vmatpush.bf16.msra.mxu0 0
    %603 = vmatpush.bf16.msra.mxu0 0
    %604 = vmatpush.bf16.msra.mxu0 0
    %605 = vmatpush.bf16.msra.mxu0 0
    %606 = vmatpush.bf16.msra.mxu0 0
    %607 = vmatpush.bf16.msra.mxu0 %v468
    %608 = vmatmul.bf16.gmra.mxu0 %v520
    %v609 = vpop.f32.mrf.mxu0
    %v610 = vadd.f32 %v597, %v609
    %v611 = vpop.f32.mrf.mxu0
    %612 = vdwg.mxu0
    %v613 = vmax.f32 %v610, 0.0
    %v614 = vpack.c.bf16 %v613, %v613
    %v615 = vld [vmem:[#allocation8] sm:$0xf]
    %v616 = vld [vmem:[#allocation8 + $0x4] sm:$0xf]
    %v617 = vld [vmem:[#allocation8 + $0x8] sm:$0xf]
    %v618 = vld [vmem:[#allocation8 + $0xc] sm:$0xf]
    %v619 = vld [vmem:[#allocation8 + $0x10] sm:$0xf]
    %v620 = vld [vmem:[#allocation8 + $0x14] sm:$0xf]
    %v621 = vld [vmem:[#allocation8 + $0x18] sm:$0xf]
    %v622 = vld [vmem:[#allocation8 + $0x1c] sm:$0xf]
    %v623 = vld [vmem:[#allocation8 + $0x20] sm:$0xf]
    %v624 = vld [vmem:[#allocation8 + $0x24] sm:$0xf]
    %v625 = vld [vmem:[#allocation8 + $0x28] sm:$0xf]
    %v626 = vld [vmem:[#allocation8 + $0x2c] sm:$0xf]
    %v627 = vld [vmem:[#allocation8 + $0x30] sm:$0xf]
    %v628 = vld [vmem:[#allocation8 + $0x34] sm:$0xf]
    %v629 = vld [vmem:[#allocation8 + $0x38] sm:$0xf]
    %v630 = vld [vmem:[#allocation8 + $0x3c] sm:$0xf]
    %v631 = vperm.slane %v96, 1
    %v648 = vunpack.c.l.b16 %v615
    %v649 = vunpack.c.l.b16 %v616
    %v650 = vunpack.c.l.b16 %v617
    %v651 = vunpack.c.l.b16 %v618
    %v652 = vunpack.c.l.b16 %v619
    %v653 = vunpack.c.l.b16 %v620
    %v654 = vunpack.c.l.b16 %v621
    %v655 = vunpack.c.l.b16 %v622
    %v656 = vunpack.c.l.b16 %v623
    %v657 = vunpack.c.l.b16 %v624
    %v658 = vunpack.c.l.b16 %v625
    %v659 = vunpack.c.l.b16 %v626
    %v660 = vunpack.c.l.b16 %v627
    %v661 = vunpack.c.l.b16 %v628
    %v662 = vunpack.c.l.b16 %v629
    %v663 = vunpack.c.l.b16 %v630
    %v664 = vpack.c.b16 %v649, %v648
    %v665 = vpack.c.b16 %v651, %v650
    %v666 = vpack.c.b16 %v653, %v652
    %v667 = vpack.c.b16 %v655, %v654
    %v668 = vpack.c.b16 %v657, %v656
    %v669 = vpack.c.b16 %v659, %v658
    %v670 = vpack.c.b16 %v661, %v660
    %v671 = vpack.c.b16 %v663, %v662
    %680 = vmatpush.bf16.msra.mxu0 %v671
    %681 = vmatpush.bf16.msra.mxu0 %v670
    %682 = vmatpush.bf16.msra.mxu0 %v669
    %683 = vmatpush.bf16.msra.mxu0 %v668
    %684 = vmatpush.bf16.msra.mxu0 %v667
    %685 = vmatpush.bf16.msra.mxu0 %v666
    %686 = vmatpush.bf16.msra.mxu0 %v665
    %687 = vmatpush.bf16.msra.mxu0 %v664
    %688 = vmatmul.bf16.gmra.mxu0 %v614
    %v689 = vpop.f32.mrf.mxu0
    %v690 = vadd.f32 %v631, %v689
    %v691 = vpop.f32.mrf.mxu0
    %692 = vdwg.mxu0
    %v693 = vmax.f32 %v690, 0.0
    %v694 = vpack.c.bf16 %v693, %v693
    %v695 = vld [vmem:[#allocation10] sm:$0xf]
    %v696 = vld [vmem:[#allocation10 + $0x4] sm:$0xf]
    %v697 = vld [vmem:[#allocation10 + $0x8] sm:$0xf]
    %v698 = vld [vmem:[#allocation10 + $0xc] sm:$0xf]
    %v699 = vld [vmem:[#allocation10 + $0x10] sm:$0xf]
    %v700 = vld [vmem:[#allocation10 + $0x14] sm:$0xf]
    %v701 = vld [vmem:[#allocation10 + $0x18] sm:$0xf]
    %v702 = vld [vmem:[#allocation10 + $0x1c] sm:$0xf]
    %v703 = vld [vmem:[#allocation10 + $0x20] sm:$0xf]
    %v704 = vld [vmem:[#allocation10 + $0x24] sm:$0xf]
    %v705 = vld [vmem:[#allocation10 + $0x28] sm:$0xf]
    %v706 = vld [vmem:[#allocation10 + $0x2c] sm:$0xf]
    %v707 = vld [vmem:[#allocation10 + $0x30] sm:$0xf]
    %v708 = vld [vmem:[#allocation10 + $0x34] sm:$0xf]
    %v709 = vld [vmem:[#allocation10 + $0x38] sm:$0xf]
    %v710 = vld [vmem:[#allocation10 + $0x3c] sm:$0xf]
    %v711 = vperm.slane %v96, 2
    %v728 = vunpack.c.l.b16 %v695
    %v729 = vunpack.c.l.b16 %v696
    %v730 = vunpack.c.l.b16 %v697
    %v731 = vunpack.c.l.b16 %v698
    %v732 = vunpack.c.l.b16 %v699
    %v733 = vunpack.c.l.b16 %v700
    %v734 = vunpack.c.l.b16 %v701
    %v735 = vunpack.c.l.b16 %v702
    %v736 = vunpack.c.l.b16 %v703
    %v737 = vunpack.c.l.b16 %v704
    %v738 = vunpack.c.l.b16 %v705
    %v739 = vunpack.c.l.b16 %v706
    %v740 = vunpack.c.l.b16 %v707
    %v741 = vunpack.c.l.b16 %v708
    %v742 = vunpack.c.l.b16 %v709
    %v743 = vunpack.c.l.b16 %v710
    %v744 = vpack.c.b16 %v729, %v728
    %v745 = vpack.c.b16 %v731, %v730
    %v746 = vpack.c.b16 %v733, %v732
    %v747 = vpack.c.b16 %v735, %v734
    %v748 = vpack.c.b16 %v737, %v736
    %v749 = vpack.c.b16 %v739, %v738
    %v750 = vpack.c.b16 %v741, %v740
    %v751 = vpack.c.b16 %v743, %v742
    %760 = vmatpush.bf16.msra.mxu0 %v751
    %761 = vmatpush.bf16.msra.mxu0 %v750
    %762 = vmatpush.bf16.msra.mxu0 %v749
    %763 = vmatpush.bf16.msra.mxu0 %v748
    %764 = vmatpush.bf16.msra.mxu0 %v747
    %765 = vmatpush.bf16.msra.mxu0 %v746
    %766 = vmatpush.bf16.msra.mxu0 %v745
    %767 = vmatpush.bf16.msra.mxu0 %v744
    %768 = vmatmul.bf16.gmra.mxu0 %v694
    %v769 = vpop.f32.mrf.mxu0
    %v770 = vadd.f32 %v711, %v769
    %v771 = vpop.f32.mrf.mxu0
    %772 = vdwg.mxu0
    %vm773 = vcmask 1041408
    %v774 = vsel %vm773, %v770, -inf
    %775 = vmax.xlane.f32.xlu0 %v774
    %v776 = vpop.xlane.xlu0 %775
    %v777 = vsub.f32 %v770, %v776
    %v778 = vmul.f32 %v777, 1.442695
    %v779 = vpow.pop %v778
    %v780 = vsel %vm773, %v779, 0.0
    %781 = vadd.xlane.f32.xlu0 %v780
    %v782 = vpop.xlane.xlu0 %781
    %v783 = vlog2.pop %v782
    %v784 = vmul.f32 %v783, 0.6931472
    %v785 = vsub.f32 %v777, %v784
    %vm786 = vcmask 74752
    %787 = vst.msk [vmem:[#allocation11] sm:$0x3] %vm786, %v785
    // Predicated region
    $region42: #{tpu_custom_call.1} parent=1 // pred_check
      _
    $region43: #{tpu_custom_call.1} parent=1 // pred_check_branch
      %789 = sbr.rel (0) target = $region45
    $region44: #{tpu_custom_call.1} parent=1 // pred_region
      %791 = vsyncadd [#allocation4], 0
      %s793 = sshll.u32 [#allocation11], 4
      %s794 = int_to_ptr.vmem [resolvable:$true] %s793
      %s795 = sshll.u32 %s5, 4
      %s796 = int_to_ptr.hbm [resolvable:$true] %s795
      %798 = dma.vmem_to_hbm [thread:$0]  %s794, 32, %s796, [#allocation4]
    $region45: #{tpu_custom_call.1} parent=1 // pred_fallthru
      _
    // Predicated region
    $region46: #{tpu_custom_call.1} parent=1 // pred_check
      _
    $region47: #{tpu_custom_call.1} parent=1 // pred_check_branch
      %800 = sbr.rel (0) target = $region49
    $region48: #{tpu_custom_call.1} parent=1 // pred_region
      %802 = dma.done [#allocation4], 32
    $region49: #{tpu_custom_call.1} parent=1 // pred_fallthru
      _
    %803 = vsyncpa [#allocation3], 1
    %804 = vsyncpa [#allocation6], 1
    %805 = vsyncpa [#allocation9], 1
    %806 = vsyncpa [#allocation4], 1

</llo_original>
